<compile_context>
chip_gen: v7x
topology: tpu7x:2x2x1
jax: 0.10.0
libtpu: 0.0.40
codegen_flags: <defaults>
</compile_context>

<pallas_src>
import math

import jax
import jax.numpy as jnp
from jax import lax
from jax.experimental import pallas as pl
from jax.experimental.pallas import tpu as pltpu


def _to_2tuple(v):
    return tuple(v) if isinstance(v, (tuple, list)) else (v, v)


def _get_pad_shape(input_hw, kernel_size, stride, dilation):
    """Exactly mirrors AdaptivePadding.get_pad_shape."""
    input_h, input_w = input_hw
    kernel_h, kernel_w = kernel_size
    stride_h, stride_w = stride
    dil_h, dil_w = dilation
    output_h = math.ceil(input_h / stride_h)
    output_w = math.ceil(input_w / stride_w)
    pad_h = max((output_h - 1) * stride_h + (kernel_h - 1) * dil_h + 1 - input_h, 0)
    pad_w = max((output_w - 1) * stride_w + (kernel_w - 1) * dil_w + 1 - input_w, 0)
    return pad_h, pad_w


# Max H for which the flat lane-dense general kernel is fully unrolled
# (~2 static stores per input row).  Above this, switch to the H-tiled path.
_MAX_UNROLL_H = 256
_TARGET_STEPS = 4  # aim for >= this many grid steps (megacore + DMA overlap)


def _vmem_capacity_bytes():
    cap = 64 << 20  # conservative default (v7x)
    try:
        cap = int(getattr(pltpu.get_tpu_info(), "vmem_capacity_bytes", cap))
    except Exception:
        pass
    return cap


def _pair_budget_bytes(vmem_cap):
    # Per-grid-step budget for (input tile + output tile).  Pallas double
    # buffers both, so live VMEM ~= 2x this.  ~8 MiB on v7x (64 MiB VMEM),
    # ~16 MiB on v5e/v6e (128 MiB VMEM).
    return max(4 << 20, min(16 << 20, vmem_cap // 8))


def _vmem_limit(pair_bytes, vmem_cap):
    # Double-buffered in+out tiles plus headroom, clamped below physical VMEM.
    want = 2 * pair_bytes + (2 << 20)
    return int(min(vmem_cap - (4 << 20), max(32 << 20, want)))


def _pick_rows(nrows, per_row_bytes, sublane, budget):
    """Rows per grid step: sublane-aligned, fits the VMEM budget, and small
    enough that there are ~_TARGET_STEPS grid steps when nrows allows it."""
    cap_vmem = max(1, budget // max(1, per_row_bytes))
    cap_steps = max(1, pl.cdiv(nrows, _TARGET_STEPS))
    rc = min(cap_vmem, cap_steps)
    rc = (rc // sublane) * sublane
    if rc == 0:
        rc = min(sublane, nrows)  # block == full row extent is always legal
    return min(rc, nrows)


def adaptive_padding(x, kernel_size=1, stride=1, dilation=1, padding="corner"):
    """Pallas implementation of AdaptivePadding.forward.

    x: (N, C, H, W) array.  Returns (N, C, H + pad_h, W + pad_w).
    """
    assert padding in ("same", "corner")
    kernel_size = _to_2tuple(kernel_size)
    stride = _to_2tuple(stride)
    dilation = _to_2tuple(dilation)

    N, C, H, W = x.shape
    pad_h, pad_w = _get_pad_shape((H, W), kernel_size, stride, dilation)
    if pad_h == 0 and pad_w == 0:
        return x  # PyTorch returns the input unchanged in this case.

    if padding == "corner":
        top, left = 0, 0
    else:  # "same"
        top, left = pad_h // 2, pad_w // 2
    bottom, right = pad_h - top, pad_w - left

    Ho, Wo = H + pad_h, W + pad_w
    NC = N * C
    dtype = x.dtype
    itemsize = x.dtype.itemsize
    sublane = 8 * max(1, 4 // itemsize)  # f32: 8, bf16: 16, int8/fp8: 32

    vmem_cap = _vmem_capacity_bytes()
    budget = _pair_budget_bytes(vmem_cap)
    HW, HoWo = H * W, Ho * Wo
    per_row_bytes = (HW + HoWo) * itemsize

    # ----------------------------------------------------------------------
    # Path 1: flat lane-dense path.  Rows = N*C (sublane axis), lanes = the
    # flattened spatial extent, so both input reads and output writebacks are
    # wide lane-dense DMAs even when W / Wo < 128.
    # ----------------------------------------------------------------------
    flat_fits = min(NC, sublane) * per_row_bytes <= budget
    if flat_fits and (pad_w == 0 or H <= _MAX_UNROLL_H):
        rc = _pick_rows(NC, per_row_bytes, sublane, budget)
        xf = x.reshape(NC, HW)  # contiguous reshape: free

        if pad_w == 0:
            def kernel(x_ref, o_ref):
                # One wide interior copy + (at most) two zero strips.
                if top:
                    o_ref[:, :top * W] = jnp.zeros((rc, top * W), dtype)
                o_ref[:, top * W: top * W + HW] = x_ref[...]
                if bottom:
                    o_ref[:, top * W + HW:] = jnp.zeros((rc, bottom * W), dtype)
        else:
            gap = Wo - W                      # right pad of row h + left pad of row h+1
            lead = top * Wo + left            # top pad rows + left pad of first data row
            tail = bottom * Wo + right        # right pad of last data row + bottom rows

            def kernel(x_ref, o_ref):
                zgap = jnp.zeros((rc, gap), dtype)   # hoisted: no per-iter broadcast
                if lead:
                    o_ref[:, :lead] = jnp.zeros((rc, lead), dtype)
                for h in range(H):                   # static unroll (H <= _MAX_UNROLL_H)
                    dst = (top + h) * Wo + left
                    o_ref[:, dst:dst + W] = x_ref[:, h * W:h * W + W]
                    if h + 1 < H:
                        o_ref[:, dst + W:dst + W + gap] = zgap
                if tail:
                    o_ref[:, HoWo - tail:] = jnp.zeros((rc, tail), dtype)

        out = pl.pallas_call(
            kernel,
            out_shape=jax.ShapeDtypeStruct((NC, HoWo), dtype),
            grid=(pl.cdiv(NC, rc),),
            in_specs=[pl.BlockSpec((rc, HW), lambda i: (i, 0))],
            out_specs=pl.BlockSpec((rc, HoWo), lambda i: (i, 0)),
            compiler_params=pltpu.CompilerParams(
                dimension_semantics=("parallel",),
                vmem_limit_bytes=_vmem_limit(rc * per_row_bytes, vmem_cap)),
        )(xf)
        return out.reshape(N, C, Ho, Wo)

    # ----------------------------------------------------------------------
    # Path 2: H-tiled path (top == 0: all "corner" cases, and "same" with
    # pad_h <= 1).  Used for tall inputs / large spatial slices so the
    # per-step VMEM footprint stays bounded (critical on v7x's 64 MiB VMEM).
    # Lane dim is Wo, which is large in this regime.
    # ----------------------------------------------------------------------
    if top == 0 and H >= sublane:
        th_cap = max(1, budget // max(1, (W + Wo) * itemsize))
        th = max(sublane, (min(th_cap, H) // sublane) * sublane)
        n_in_blocks = pl.cdiv(H, th)
        n_out_blocks = pl.cdiv(Ho, th)
        xf = x.reshape(NC, H, W)

        def kernel(x_ref, o_ref):
            j = pl.program_id(1)
            # Global output rows covered by this block: [j*th, j*th + th).
            # Source row == output row (top == 0); rows >= H are padding.
            rows = j * th + lax.broadcasted_iota(jnp.int32, (1, th, W), 1)
            data = jnp.where(rows < H, x_ref[...], jnp.zeros((1, th, W), dtype))
            o_ref[:, :, left:left + W] = data
            if left:
                o_ref[:, :, :left] = jnp.zeros((1, th, left), dtype)
            if right:
                o_ref[:, :, left + W:] = jnp.zeros((1, th, right), dtype)

        out = pl.pallas_call(
            kernel,
            out_shape=jax.ShapeDtypeStruct((NC, Ho, Wo), dtype),
            grid=(NC, n_out_blocks),
            in_specs=[pl.BlockSpec(
                (1, th, W),
                # Clamp so pad-only chunks re-read a valid block; its contents
                # are fully masked to zero in the kernel.
                lambda i, j: (i, jnp.minimum(j, n_in_blocks - 1), 0))],
            out_specs=pl.BlockSpec((1, th, Wo), lambda i, j: (i, j, 0)),
            compiler_params=pltpu.CompilerParams(
                dimension_semantics=("parallel", "parallel"),
                vmem_limit_bytes=_vmem_limit(th * (W + Wo) * itemsize, vmem_cap)),
        )(xf)
        return out.reshape(N, C, Ho, Wo)

    # ----------------------------------------------------------------------
    # Path 3: whole-spatial-slice blocks ("same" padding with top > 0 on a
    # tall input).  Output lane dim is Wo (not flattened) -- acceptable since
    # Wo is large whenever this path is reached.
    # ----------------------------------------------------------------------
    if 2 * per_row_bytes + (6 << 20) <= vmem_cap:
        rc = max(1, min(budget // per_row_bytes, pl.cdiv(NC, _TARGET_STEPS)))
        xf = x.reshape(NC, H, W)

        def kernel(x_ref, o_ref):
            o_ref[:, top:top + H, left:left + W] = x_ref[...]
            if top:
                o_ref[:, :top, :] = jnp.zeros((rc, top, Wo), dtype)
            if bottom:
                o_ref[:, top + H:, :] = jnp.zeros((rc, bottom, Wo), dtype)
            if left:
                o_ref[:, top:top + H, :left] = jnp.zeros((rc, H, left), dtype)
            if right:
                o_ref[:, top:top + H, left + W:] = jnp.zeros((rc, H, right), dtype)

        out = pl.pallas_call(
            kernel,
            out_shape=jax.ShapeDtypeStruct((NC, Ho, Wo), dtype),
            grid=(pl.cdiv(NC, rc),),
            in_specs=[pl.BlockSpec((rc, H, W), lambda i: (i, 0, 0))],
            out_specs=pl.BlockSpec((rc, Ho, Wo), lambda i: (i, 0, 0)),
            compiler_params=pltpu.CompilerParams(
                dimension_semantics=("parallel",),
                vmem_limit_bytes=_vmem_limit(rc * per_row_bytes, vmem_cap)),
        )(xf)
        return out.reshape(N, C, Ho, Wo)

    # TODO(synk): "same" padding (top > 0) with a spatial slice too large for
    # VMEM needs an H-tiled kernel with a row-offset-aware input pipeline; for
    # that rare case fall back to XLA's pad.
    return jnp.pad(x, ((0, 0), (0, 0), (top, bottom), (left, right)))


def _reference(x, kernel_size, stride, dilation, padding):
    """Pure-JAX reference mirroring F.pad semantics in the PyTorch module."""
    kernel_size = _to_2tuple(kernel_size)
    stride = _to_2tuple(stride)
    dilation = _to_2tuple(dilation)
    H, W = x.shape[-2:]
    pad_h, pad_w = _get_pad_shape((H, W), kernel_size, stride, dilation)
    if pad_h == 0 and pad_w == 0:
        return x
    if padding == "corner":
        pads = ((0, 0), (0, 0), (0, pad_h), (0, pad_w))
    else:
        pads = ((0, 0), (0, 0),
                (pad_h // 2, pad_h - pad_h // 2),
                (pad_w // 2, pad_w - pad_w // 2))
    return jnp.pad(x, pads)


if __name__ == "__main__":
    key = jax.random.PRNGKey(0)
    keys = jax.random.split(key, 8)
    ok = True

    def run_case(x, ks, st, dl, mode):
        out = jax.block_until_ready(
            adaptive_padding(x, kernel_size=ks, stride=st, dilation=dl, padding=mode))
        ref = _reference(x, ks, st, dl, mode)
        good = (out.shape == ref.shape) and bool(jnp.array_equal(out, ref))
        if not good:
            print("MISMATCH:", x.shape, x.dtype, mode, out.shape, ref.shape)
        return good

    # Both axes padded -> flat lane-dense general path (15x17 -> 16x32).
    x = jax.random.normal(keys[0], (2, 4, 15, 17), dtype=jnp.float32)
    ok &= run_case(x, 16, 16, 1, "corner")
    ok &= run_case(x, 16, 16, 1, "same")

    # bf16 through the flat general path.
    xb = jax.random.normal(keys[1], (2, 4, 15, 17), dtype=jnp.bfloat16)
    ok &= run_case(xb, 16, 16, 1, "corner")

    # H-only padding -> single-wide-copy flat path ("same" has top > 0 here).
    x2 = jax.random.normal(keys[2], (2, 4, 14, 16), dtype=jnp.float32)
    ok &= run_case(x2, 16, 16, 1, "corner")
    ok &= run_case(x2, 16, 16, 1, "same")

    # NC (=21) not a multiple of the sublane count -> cdiv tiling with a
    # partial last block (3 grid steps of 8 rows).
    x3 = jax.random.normal(keys[3], (3, 7, 15, 17), dtype=jnp.float32)
    ok &= run_case(x3, 16, 16, 1, "corner")
    ok &= run_case(x3, 16, 16, 1, "same")

    # Tall input (H > unroll bound) -> H-tiled path with clamped input blocks.
    x4 = jax.random.normal(keys[4], (1, 2, 260, 17), dtype=jnp.float32)
    ok &= run_case(x4, 16, 16, 1, "corner")

    # Tall input with "same" padding (top > 0) -> whole-slice 3D path.
    x5 = jax.random.normal(keys[5], (1, 2, 260, 17), dtype=jnp.float32)
    ok &= run_case(x5, 16, 16, 1, "same")

    # No-padding pass-through path.
    x6 = jax.random.normal(keys[6], (2, 4, 16, 32), dtype=jnp.float32)
    out6 = jax.block_until_ready(adaptive_padding(x6, 16, 16, 1, "corner"))
    ok &= bool(jnp.array_equal(out6, x6))

    if ok:
        print("KERNEL_OK")
</pallas_src>

<mosaic_0001>
module attributes {stable_mosaic.version = 11 : i64} {
  func.func @kernel(%arg0: i32, %arg1: memref<8x255xf32, #tpu.memory_space<vmem>>, %arg2: memref<8x512xf32, #tpu.memory_space<vmem>>) attributes {dimension_semantics = [#tpu.dimension_semantics<parallel>], iteration_bounds = array<i64: 1>, scalar_prefetch = 0 : i64, scratch_operands = 0 : i64, tpu.core_type = #tpu.core_type<tc>, window_params = [{transform_indices = @transform_0, window_bounds = array<i64: 8, 255>}, {transform_indices = @transform_1, window_bounds = array<i64: 8, 512>}]} {
    %cst = arith.constant 0.000000e+00 : f32
    %0 = vector.broadcast %cst : f32 to vector<8x15xf32>
    %c0 = arith.constant 0 : index
    %c0_0 = arith.constant 0 : index
    %1 = vector.load %arg1[%c0, %c0_0] : memref<8x255xf32, #tpu.memory_space<vmem>>, vector<8x17xf32>
    %c0_1 = arith.constant 0 : index
    %c0_2 = arith.constant 0 : index
    %2 = vector.load %arg2[%c0_1, %c0_2] : memref<8x512xf32, #tpu.memory_space<vmem>>, vector<8x17xf32>
    tpu.vector_store %arg2[%c0_1, %c0_2], %1 {strides = array<i32>} : memref<8x512xf32, #tpu.memory_space<vmem>>, vector<8x17xf32>,
    %c0_3 = arith.constant 0 : index
    %c17 = arith.constant 17 : index
    %3 = vector.load %arg2[%c0_3, %c17] : memref<8x512xf32, #tpu.memory_space<vmem>>, vector<8x15xf32>
    tpu.vector_store %arg2[%c0_3, %c17], %0 {strides = array<i32>} : memref<8x512xf32, #tpu.memory_space<vmem>>, vector<8x15xf32>,
    %c0_4 = arith.constant 0 : index
    %c17_5 = arith.constant 17 : index
    %4 = vector.load %arg1[%c0_4, %c17_5] : memref<8x255xf32, #tpu.memory_space<vmem>>, vector<8x17xf32>
    %c0_6 = arith.constant 0 : index
    %c32 = arith.constant 32 : index
    %5 = vector.load %arg2[%c0_6, %c32] : memref<8x512xf32, #tpu.memory_space<vmem>>, vector<8x17xf32>
    tpu.vector_store %arg2[%c0_6, %c32], %4 {strides = array<i32>} : memref<8x512xf32, #tpu.memory_space<vmem>>, vector<8x17xf32>,
    %c0_7 = arith.constant 0 : index
    %c49 = arith.constant 49 : index
    %6 = vector.load %arg2[%c0_7, %c49] : memref<8x512xf32, #tpu.memory_space<vmem>>, vector<8x15xf32>
    tpu.vector_store %arg2[%c0_7, %c49], %0 {strides = array<i32>} : memref<8x512xf32, #tpu.memory_space<vmem>>, vector<8x15xf32>,
    %c0_8 = arith.constant 0 : index
    %c34 = arith.constant 34 : index
    %7 = vector.load %arg1[%c0_8, %c34] : memref<8x255xf32, #tpu.memory_space<vmem>>, vector<8x17xf32>
    %c0_9 = arith.constant 0 : index
    %c64 = arith.constant 64 : index
    %8 = vector.load %arg2[%c0_9, %c64] : memref<8x512xf32, #tpu.memory_space<vmem>>, vector<8x17xf32>
    tpu.vector_store %arg2[%c0_9, %c64], %7 {strides = array<i32>} : memref<8x512xf32, #tpu.memory_space<vmem>>, vector<8x17xf32>,
    %c0_10 = arith.constant 0 : index
    %c81 = arith.constant 81 : index
    %9 = vector.load %arg2[%c0_10, %c81] : memref<8x512xf32, #tpu.memory_space<vmem>>, vector<8x15xf32>
    tpu.vector_store %arg2[%c0_10, %c81], %0 {strides = array<i32>} : memref<8x512xf32, #tpu.memory_space<vmem>>, vector<8x15xf32>,
    %c0_11 = arith.constant 0 : index
    %c51 = arith.constant 51 : index
    %10 = vector.load %arg1[%c0_11, %c51] : memref<8x255xf32, #tpu.memory_space<vmem>>, vector<8x17xf32>
    %c0_12 = arith.constant 0 : index
    %c96 = arith.constant 96 : index
    %11 = vector.load %arg2[%c0_12, %c96] : memref<8x512xf32, #tpu.memory_space<vmem>>, vector<8x17xf32>
    tpu.vector_store %arg2[%c0_12, %c96], %10 {strides = array<i32>} : memref<8x512xf32, #tpu.memory_space<vmem>>, vector<8x17xf32>,
    %c0_13 = arith.constant 0 : index
    %c113 = arith.constant 113 : index
    %12 = vector.load %arg2[%c0_13, %c113] : memref<8x512xf32, #tpu.memory_space<vmem>>, vector<8x15xf32>
    tpu.vector_store %arg2[%c0_13, %c113], %0 {strides = array<i32>} : memref<8x512xf32, #tpu.memory_space<vmem>>, vector<8x15xf32>,
    %c0_14 = arith.constant 0 : index
    %c68 = arith.constant 68 : index
    %13 = vector.load %arg1[%c0_14, %c68] : memref<8x255xf32, #tpu.memory_space<vmem>>, vector<8x17xf32>
    %c0_15 = arith.constant 0 : index
    %c128 = arith.constant 128 : index
    %14 = vector.load %arg2[%c0_15, %c128] : memref<8x512xf32, #tpu.memory_space<vmem>>, vector<8x17xf32>
    tpu.vector_store %arg2[%c0_15, %c128], %13 {strides = array<i32>} : memref<8x512xf32, #tpu.memory_space<vmem>>, vector<8x17xf32>,
    %c0_16 = arith.constant 0 : index
    %c145 = arith.constant 145 : index
    %15 = vector.load %arg2[%c0_16, %c145] : memref<8x512xf32, #tpu.memory_space<vmem>>, vector<8x15xf32>
    tpu.vector_store %arg2[%c0_16, %c145], %0 {strides = array<i32>} : memref<8x512xf32, #tpu.memory_space<vmem>>, vector<8x15xf32>,
    %c0_17 = arith.constant 0 : index
    %c85 = arith.constant 85 : index
    %16 = vector.load %arg1[%c0_17, %c85] : memref<8x255xf32, #tpu.memory_space<vmem>>, vector<8x17xf32>
    %c0_18 = arith.constant 0 : index
    %c160 = arith.constant 160 : index
    %17 = vector.load %arg2[%c0_18, %c160] : memref<8x512xf32, #tpu.memory_space<vmem>>, vector<8x17xf32>
    tpu.vector_store %arg2[%c0_18, %c160], %16 {strides = array<i32>} : memref<8x512xf32, #tpu.memory_space<vmem>>, vector<8x17xf32>,
    %c0_19 = arith.constant 0 : index
    %c177 = arith.constant 177 : index
    %18 = vector.load %arg2[%c0_19, %c177] : memref<8x512xf32, #tpu.memory_space<vmem>>, vector<8x15xf32>
    tpu.vector_store %arg2[%c0_19, %c177], %0 {strides = array<i32>} : memref<8x512xf32, #tpu.memory_space<vmem>>, vector<8x15xf32>,
    %c0_20 = arith.constant 0 : index
    %c102 = arith.constant 102 : index
    %19 = vector.load %arg1[%c0_20, %c102] : memref<8x255xf32, #tpu.memory_space<vmem>>, vector<8x17xf32>
    %c0_21 = arith.constant 0 : index
    %c192 = arith.constant 192 : index
    %20 = vector.load %arg2[%c0_21, %c192] : memref<8x512xf32, #tpu.memory_space<vmem>>, vector<8x17xf32>
    tpu.vector_store %arg2[%c0_21, %c192], %19 {strides = array<i32>} : memref<8x512xf32, #tpu.memory_space<vmem>>, vector<8x17xf32>,
    %c0_22 = arith.constant 0 : index
    %c209 = arith.constant 209 : index
    %21 = vector.load %arg2[%c0_22, %c209] : memref<8x512xf32, #tpu.memory_space<vmem>>, vector<8x15xf32>
    tpu.vector_store %arg2[%c0_22, %c209], %0 {strides = array<i32>} : memref<8x512xf32, #tpu.memory_space<vmem>>, vector<8x15xf32>,
    %c0_23 = arith.constant 0 : index
    %c119 = arith.constant 119 : index
    %22 = vector.load %arg1[%c0_23, %c119] : memref<8x255xf32, #tpu.memory_space<vmem>>, vector<8x17xf32>
    %c0_24 = arith.constant 0 : index
    %c224 = arith.constant 224 : index
    %23 = vector.load %arg2[%c0_24, %c224] : memref<8x512xf32, #tpu.memory_space<vmem>>, vector<8x17xf32>
    tpu.vector_store %arg2[%c0_24, %c224], %22 {strides = array<i32>} : memref<8x512xf32, #tpu.memory_space<vmem>>, vector<8x17xf32>,
    %c0_25 = arith.constant 0 : index
    %c241 = arith.constant 241 : index
    %24 = vector.load %arg2[%c0_25, %c241] : memref<8x512xf32, #tpu.memory_space<vmem>>, vector<8x15xf32>
    tpu.vector_store %arg2[%c0_25, %c241], %0 {strides = array<i32>} : memref<8x512xf32, #tpu.memory_space<vmem>>, vector<8x15xf32>,
    %c0_26 = arith.constant 0 : index
    %c136 = arith.constant 136 : index
    %25 = vector.load %arg1[%c0_26, %c136] : memref<8x255xf32, #tpu.memory_space<vmem>>, vector<8x17xf32>
    %c0_27 = arith.constant 0 : index
    %c256 = arith.constant 256 : index
    %26 = vector.load %arg2[%c0_27, %c256] : memref<8x512xf32, #tpu.memory_space<vmem>>, vector<8x17xf32>
    tpu.vector_store %arg2[%c0_27, %c256], %25 {strides = array<i32>} : memref<8x512xf32, #tpu.memory_space<vmem>>, vector<8x17xf32>,
    %c0_28 = arith.constant 0 : index
    %c273 = arith.constant 273 : index
    %27 = vector.load %arg2[%c0_28, %c273] : memref<8x512xf32, #tpu.memory_space<vmem>>, vector<8x15xf32>
    tpu.vector_store %arg2[%c0_28, %c273], %0 {strides = array<i32>} : memref<8x512xf32, #tpu.memory_space<vmem>>, vector<8x15xf32>,
    %c0_29 = arith.constant 0 : index
    %c153 = arith.constant 153 : index
    %28 = vector.load %arg1[%c0_29, %c153] : memref<8x255xf32, #tpu.memory_space<vmem>>, vector<8x17xf32>
    %c0_30 = arith.constant 0 : index
    %c288 = arith.constant 288 : index
    %29 = vector.load %arg2[%c0_30, %c288] : memref<8x512xf32, #tpu.memory_space<vmem>>, vector<8x17xf32>
    tpu.vector_store %arg2[%c0_30, %c288], %28 {strides = array<i32>} : memref<8x512xf32, #tpu.memory_space<vmem>>, vector<8x17xf32>,
    %c0_31 = arith.constant 0 : index
    %c305 = arith.constant 305 : index
    %30 = vector.load %arg2[%c0_31, %c305] : memref<8x512xf32, #tpu.memory_space<vmem>>, vector<8x15xf32>
    tpu.vector_store %arg2[%c0_31, %c305], %0 {strides = array<i32>} : memref<8x512xf32, #tpu.memory_space<vmem>>, vector<8x15xf32>,
    %c0_32 = arith.constant 0 : index
    %c170 = arith.constant 170 : index
    %31 = vector.load %arg1[%c0_32, %c170] : memref<8x255xf32, #tpu.memory_space<vmem>>, vector<8x17xf32>
    %c0_33 = arith.constant 0 : index
    %c320 = arith.constant 320 : index
    %32 = vector.load %arg2[%c0_33, %c320] : memref<8x512xf32, #tpu.memory_space<vmem>>, vector<8x17xf32>
    tpu.vector_store %arg2[%c0_33, %c320], %31 {strides = array<i32>} : memref<8x512xf32, #tpu.memory_space<vmem>>, vector<8x17xf32>,
    %c0_34 = arith.constant 0 : index
    %c337 = arith.constant 337 : index
    %33 = vector.load %arg2[%c0_34, %c337] : memref<8x512xf32, #tpu.memory_space<vmem>>, vector<8x15xf32>
    tpu.vector_store %arg2[%c0_34, %c337], %0 {strides = array<i32>} : memref<8x512xf32, #tpu.memory_space<vmem>>, vector<8x15xf32>,
    %c0_35 = arith.constant 0 : index
    %c187 = arith.constant 187 : index
    %34 = vector.load %arg1[%c0_35, %c187] : memref<8x255xf32, #tpu.memory_space<vmem>>, vector<8x17xf32>
    %c0_36 = arith.constant 0 : index
    %c352 = arith.constant 352 : index
    %35 = vector.load %arg2[%c0_36, %c352] : memref<8x512xf32, #tpu.memory_space<vmem>>, vector<8x17xf32>
    tpu.vector_store %arg2[%c0_36, %c352], %34 {strides = array<i32>} : memref<8x512xf32, #tpu.memory_space<vmem>>, vector<8x17xf32>,
    %c0_37 = arith.constant 0 : index
    %c369 = arith.constant 369 : index
    %36 = vector.load %arg2[%c0_37, %c369] : memref<8x512xf32, #tpu.memory_space<vmem>>, vector<8x15xf32>
    tpu.vector_store %arg2[%c0_37, %c369], %0 {strides = array<i32>} : memref<8x512xf32, #tpu.memory_space<vmem>>, vector<8x15xf32>,
    %c0_38 = arith.constant 0 : index
    %c204 = arith.constant 204 : index
    %37 = vector.load %arg1[%c0_38, %c204] : memref<8x255xf32, #tpu.memory_space<vmem>>, vector<8x17xf32>
    %c0_39 = arith.constant 0 : index
    %c384 = arith.constant 384 : index
    %38 = vector.load %arg2[%c0_39, %c384] : memref<8x512xf32, #tpu.memory_space<vmem>>, vector<8x17xf32>
    tpu.vector_store %arg2[%c0_39, %c384], %37 {strides = array<i32>} : memref<8x512xf32, #tpu.memory_space<vmem>>, vector<8x17xf32>,
    %c0_40 = arith.constant 0 : index
    %c401 = arith.constant 401 : index
    %39 = vector.load %arg2[%c0_40, %c401] : memref<8x512xf32, #tpu.memory_space<vmem>>, vector<8x15xf32>
    tpu.vector_store %arg2[%c0_40, %c401], %0 {strides = array<i32>} : memref<8x512xf32, #tpu.memory_space<vmem>>, vector<8x15xf32>,
    %c0_41 = arith.constant 0 : index
    %c221 = arith.constant 221 : index
    %40 = vector.load %arg1[%c0_41, %c221] : memref<8x255xf32, #tpu.memory_space<vmem>>, vector<8x17xf32>
    %c0_42 = arith.constant 0 : index
    %c416 = arith.constant 416 : index
    %41 = vector.load %arg2[%c0_42, %c416] : memref<8x512xf32, #tpu.memory_space<vmem>>, vector<8x17xf32>
    tpu.vector_store %arg2[%c0_42, %c416], %40 {strides = array<i32>} : memref<8x512xf32, #tpu.memory_space<vmem>>, vector<8x17xf32>,
    %c0_43 = arith.constant 0 : index
    %c433 = arith.constant 433 : index
    %42 = vector.load %arg2[%c0_43, %c433] : memref<8x512xf32, #tpu.memory_space<vmem>>, vector<8x15xf32>
    tpu.vector_store %arg2[%c0_43, %c433], %0 {strides = array<i32>} : memref<8x512xf32, #tpu.memory_space<vmem>>, vector<8x15xf32>,
    %c0_44 = arith.constant 0 : index
    %c238 = arith.constant 238 : index
    %43 = vector.load %arg1[%c0_44, %c238] : memref<8x255xf32, #tpu.memory_space<vmem>>, vector<8x17xf32>
    %c0_45 = arith.constant 0 : index
    %c448 = arith.constant 448 : index
    %44 = vector.load %arg2[%c0_45, %c448] : memref<8x512xf32, #tpu.memory_space<vmem>>, vector<8x17xf32>
    tpu.vector_store %arg2[%c0_45, %c448], %43 {strides = array<i32>} : memref<8x512xf32, #tpu.memory_space<vmem>>, vector<8x17xf32>,
    %cst_46 = arith.constant 0.000000e+00 : f32
    %45 = vector.broadcast %cst_46 : f32 to vector<8x47xf32>
    %c0_47 = arith.constant 0 : index
    %c465 = arith.constant 465 : index
    %46 = vector.load %arg2[%c0_47, %c465] : memref<8x512xf32, #tpu.memory_space<vmem>>, vector<8x47xf32>
    tpu.vector_store %arg2[%c0_47, %c465], %45 {strides = array<i32>} : memref<8x512xf32, #tpu.memory_space<vmem>>, vector<8x47xf32>,
    return
  }
  func.func @transform_0(%arg0: i32) -> (i32, i32) {
    %c0_i32 = arith.constant 0 : i32
    %c0_i32_0 = arith.constant 0 : i32
    return %arg0, %c0_i32 : i32, i32
  }
  func.func @transform_1(%arg0: i32) -> (i32, i32) {
    %c0_i32 = arith.constant 0 : i32
    %c0_i32_0 = arith.constant 0 : i32
    return %arg0, %c0_i32 : i32, i32
  }
}

</mosaic_0001>

<llo_original>
// kernel: tpu_custom_call.1
$region0: #{tpu_custom_call.1}
  #allocation0 [shape = 'u32[]', space=smem, size = 0x4, offset = 0x4, fixed_abs, tag = 'smem constant byte address 0x4 - core index']
  #allocation1 [shape = 'u32[144,128]{1,0:T(1,128)}', space=vmem, size = 0x12000, scoped, tag = 'internal scratch']
  %s0 = inlined_call_operand.hbm [shape: f32[8,255], index: 0, kind: input, shape index: {}]
  %s1 = inlined_call_operand.hbm [shape: f32[8,512], index: 1, kind: output, shape index: {}]
  %s2 = sld [smem:[#allocation0]]
  $region18: #{tpu_custom_call.1} parent=0
    _
  %s4 = ssub.s32 1, %s2
  %s5 = scalar_select 0, %s4, %s2
  $region1: #{tpu_custom_call.1} parent=0
    #allocation2 [shape = 'u8[8192]{0}', space=vmem, size = 0x2000, scoped, tag = 'input window, operand 0, single buffered']
    #allocation3 [shape = 's32[1]{0}', space=sflag, size = 0x4, scoped, tag = 'scoped memory for tpu_custom_call.1']
    #allocation4 [shape = 's32[1]{0}', space=sflag, size = 0x4, scoped, tag = 'scoped memory for tpu_custom_call.1']
    #allocation5 [shape = 'u8[16384]{0}', space=vmem, size = 0x4000, scoped, tag = 'output window, operand 0, single buffered']
    %6 = vsyncpa [#allocation3], 0
    %7 = vsyncpa [#allocation4], 0
    // Predicated region
    $region2: #{tpu_custom_call.1} parent=1 // pred_check
      _
    $region3: #{tpu_custom_call.1} parent=1 // pred_check_branch
      %9 = sbr.rel (0) target = $region5
    $region4: #{tpu_custom_call.1} parent=1 // pred_region
      %s11 = ssub.s32 256, 256
      %12 = vsyncadd [#allocation3], %s11
      %s14 = sshll.u32 [#allocation2], 4
      %s15 = int_to_ptr.vmem [resolvable:$true] %s14
      %17 = dma.hbm_to_vmem [thread:$0]  %s0, 256, %s15, [#allocation3]
    $region5: #{tpu_custom_call.1} parent=1 // pred_fallthru
      _
    // Predicated region
    $region6: #{tpu_custom_call.1} parent=1 // pred_check
      _
    $region7: #{tpu_custom_call.1} parent=1 // pred_check_branch
      %19 = sbr.rel (0) target = $region9
    $region8: #{tpu_custom_call.1} parent=1 // pred_region
      %20 = dma.done [#allocation3], 256
    $region9: #{tpu_custom_call.1} parent=1 // pred_fallthru
      _
    %v21 = vld [vmem:[#allocation2] sm:$0xff]
    %vm22 = vcmask 138240
    %23 = vst.msk [vmem:[#allocation5] sm:$0xff] %vm22, %v21
    %vm24 = vcmask 261256
    %25 = vst.msk [vmem:[#allocation5] sm:$0xff] %vm24, 0.0
    %v26 = vld [vmem:[#allocation2] sm:$0xff]
    %28 = vrot.lane.b32.xlu0 %v26, 15
    %v29 = vpop.permute.xlu0 %28
    %vm31 = vcmask 400640
    %32 = vst.msk [vmem:[#allocation5] sm:$0xff] %vm31, %v29
    %vm33 = vcmask 523656
    %34 = vst.msk [vmem:[#allocation5] sm:$0xff] %vm33, 0.0
    %v35 = vld [vmem:[#allocation2] sm:$0xff]
    %37 = vrot.lane.b32.xlu0 %v35, 30
    %v38 = vpop.permute.xlu0 %37
    %vm40 = vcmask 663040
    %41 = vst.msk [vmem:[#allocation5] sm:$0xff] %vm40, %v38
    %vm42 = vcmask 786056
    %43 = vst.msk [vmem:[#allocation5] sm:$0xff] %vm42, 0.0
    %v44 = vld [vmem:[#allocation2] sm:$0xff]
    %46 = vrot.lane.b32.xlu0 %v44, 45
    %v47 = vpop.permute.xlu0 %46
    %vm49 = vcmask 925440
    %50 = vst.msk [vmem:[#allocation5] sm:$0xff] %vm49, %v47
    %vm51 = vcmask 1048456
    %52 = vst.msk [vmem:[#allocation5] sm:$0xff] %vm51, 0.0
    %v53 = vld [vmem:[#allocation2] sm:$0xff]
    %55 = vrot.lane.b32.xlu0 %v53, 60
    %v56 = vpop.permute.xlu0 %55
    %58 = vst.msk [vmem:[#allocation5 + $0x8] sm:$0xff] %vm22, %v56
    %59 = vst.msk [vmem:[#allocation5 + $0x8] sm:$0xff] %vm24, 0.0
    %v60 = vld [vmem:[#allocation2] sm:$0xff]
    %62 = vrot.lane.b32.xlu0 %v60, 75
    %v63 = vpop.permute.xlu0 %62
    %65 = vst.msk [vmem:[#allocation5 + $0x8] sm:$0xff] %vm31, %v63
    %66 = vst.msk [vmem:[#allocation5 + $0x8] sm:$0xff] %vm33, 0.0
    %v67 = vld [vmem:[#allocation2] sm:$0xff]
    %69 = vrot.lane.b32.xlu0 %v67, 90
    %v70 = vpop.permute.xlu0 %69
    %72 = vst.msk [vmem:[#allocation5 + $0x8] sm:$0xff] %vm40, %v70
    %73 = vst.msk [vmem:[#allocation5 + $0x8] sm:$0xff] %vm42, 0.0
    %v74 = vld [vmem:[#allocation2] sm:$0xff]
    %v75 = vld [vmem:[#allocation2 + $0x8] sm:$0xff]
    %78 = vrot.lane.b32.xlu0 %v74, 105
    %v79 = vpop.permute.xlu0 %78
    %80 = vrot.lane.b32.xlu0 %v75, 105
    %v81 = vpop.permute.xlu0 %80
    %vm82 = vcmask 859136
    %v83 = vsel %vm82, %v79, %v81
    %85 = vst.msk [vmem:[#allocation5 + $0x8] sm:$0xff] %vm49, %v83
    %86 = vst.msk [vmem:[#allocation5 + $0x8] sm:$0xff] %vm51, 0.0
    %v87 = vld [vmem:[#allocation2 + $0x8] sm:$0xff]
    %89 = vrot.lane.b32.xlu0 %v87, 120
    %v90 = vpop.permute.xlu0 %89
    %92 = vst.msk [vmem:[#allocation5 + $0x10] sm:$0xff] %vm22, %v90
    %93 = vst.msk [vmem:[#allocation5 + $0x10] sm:$0xff] %vm24, 0.0
    %v94 = vld [vmem:[#allocation2 + $0x8] sm:$0xff]
    %96 = vrot.lane.b32.xlu0 %v94, 7
    %v97 = vpop.permute.xlu0 %96
    %99 = vst.msk [vmem:[#allocation5 + $0x10] sm:$0xff] %vm31, %v97
    %100 = vst.msk [vmem:[#allocation5 + $0x10] sm:$0xff] %vm33, 0.0
    %v101 = vld [vmem:[#allocation2 + $0x8] sm:$0xff]
    %103 = vrot.lane.b32.xlu0 %v101, 22
    %v104 = vpop.permute.xlu0 %103
    %106 = vst.msk [vmem:[#allocation5 + $0x10] sm:$0xff] %vm40, %v104
    %107 = vst.msk [vmem:[#allocation5 + $0x10] sm:$0xff] %vm42, 0.0
    %v108 = vld [vmem:[#allocation2 + $0x8] sm:$0xff]
    %110 = vrot.lane.b32.xlu0 %v108, 37
    %v111 = vpop.permute.xlu0 %110
    %113 = vst.msk [vmem:[#allocation5 + $0x10] sm:$0xff] %vm49, %v111
    %114 = vst.msk [vmem:[#allocation5 + $0x10] sm:$0xff] %vm51, 0.0
    %v115 = vld [vmem:[#allocation2 + $0x8] sm:$0xff]
    %117 = vrot.lane.b32.xlu0 %v115, 52
    %v118 = vpop.permute.xlu0 %117
    %120 = vst.msk [vmem:[#allocation5 + $0x18] sm:$0xff] %vm22, %v118
    %121 = vst.msk [vmem:[#allocation5 + $0x18] sm:$0xff] %vm24, 0.0
    %v122 = vld [vmem:[#allocation2 + $0x8] sm:$0xff]
    %124 = vrot.lane.b32.xlu0 %v122, 67
    %v125 = vpop.permute.xlu0 %124
    %127 = vst.msk [vmem:[#allocation5 + $0x18] sm:$0xff] %vm31, %v125
    %128 = vst.msk [vmem:[#allocation5 + $0x18] sm:$0xff] %vm33, 0.0
    %v129 = vld [vmem:[#allocation2 + $0x8] sm:$0xff]
    %131 = vrot.lane.b32.xlu0 %v129, 82
    %v132 = vpop.permute.xlu0 %131
    %134 = vst.msk [vmem:[#allocation5 + $0x18] sm:$0xff] %vm40, %v132
    %vm135 = vcmask 1048200
    %136 = vst.msk [vmem:[#allocation5 + $0x18] sm:$0xff] %vm135, 0.0
    // Predicated region
    $region10: #{tpu_custom_call.1} parent=1 // pred_check
      _
    $region11: #{tpu_custom_call.1} parent=1 // pred_check_branch
      %138 = sbr.rel (0) target = $region13
    $region12: #{tpu_custom_call.1} parent=1 // pred_region
      %s140 = ssub.s32 512, 512
      %141 = vsyncadd [#allocation4], %s140
      %s143 = sshll.u32 [#allocation5], 4
      %s144 = int_to_ptr.vmem [resolvable:$true] %s143
      %146 = dma.vmem_to_hbm [thread:$0]  %s144, 512, %s1, [#allocation4]
    $region13: #{tpu_custom_call.1} parent=1 // pred_fallthru
      _
    // Predicated region
    $region14: #{tpu_custom_call.1} parent=1 // pred_check
      _
    $region15: #{tpu_custom_call.1} parent=1 // pred_check_branch
      %148 = sbr.rel (0) target = $region17
    $region16: #{tpu_custom_call.1} parent=1 // pred_region
      %149 = dma.done [#allocation4], 512
    $region17: #{tpu_custom_call.1} parent=1 // pred_fallthru
      _
    %150 = vsyncpa [#allocation3], 1
    %151 = vsyncpa [#allocation4], 1

</llo_original>
